<compile_context>
chip_gen: v5e
topology: v5e:2x2
jax: 0.10.0
libtpu: 0.0.40
codegen_flags: <defaults>
</compile_context>

<pallas_src>
import functools
import math
import numpy as np
import jax
import jax.numpy as jnp
from jax.experimental import pallas as pl
from jax.experimental.pallas import tpu as pltpu


# -----------------------------------------------------------------------------
# Fused kernel: one batch-block per grid step, everything stays in VMEM.
#   x_ref  : (B_blk*T, D)       input rows (batch elements concatenated in time)
#   w2_ref : (D, 3*D*C1)        folded (masked-linear @ conv1-tap) weights
#   br_ref : (1, 3*D*C1)        folded hidden-bias per tap
#   b1_ref : (1, D*C1)          conv1 bias (tiled over features)
#   g_ref  : (D*C1, D)          1x1 conv (C1 -> 1) as grouped-sum matrix
#   b2_ref : (1,)  [SMEM]       scalar 1x1-conv bias
#   o_ref  : (B_blk*T, D)       output rows
# -----------------------------------------------------------------------------
def _cfi_fused_kernel(x_ref, w2_ref, br_ref, b1_ref, g_ref, b2_ref, o_ref, *, T):
    R = x_ref.shape[0]                    # B_blk * T rows in this block
    DC1 = g_ref.shape[0]                  # D * C1

    # Folded masked-linear + conv1 taps: one MXU matmul, K = D, N = 3*D*C1.
    # y[:, dt*DC1:(dt+1)*DC1] == hidden @ M[dt]  (hidden's bias already folded
    # into br, so shifting/zeroing y below also zeroes its bias share).
    y = jnp.dot(x_ref[...], w2_ref[...],
                preferred_element_type=jnp.float32) + br_ref[...]

    y_prev = y[:, :DC1]                   # tap dt=0 : needs hidden row t-1
    y_same = y[:, DC1:2 * DC1]            # tap dt=1 : aligned
    y_next = y[:, 2 * DC1:]               # tap dt=2 : needs hidden row t+1

    # Time-axis SAME padding: shift the taps by one row and zero every row
    # whose source lies outside its own element (covers the t=0 / t=T-1
    # padding AND batch-element boundaries inside the (B_blk*T)-row block).
    t_in = jax.lax.broadcasted_iota(jnp.int32, (R, DC1), 0) % T
    zrow = jnp.zeros((1, DC1), jnp.float32)
    prev_s = jnp.concatenate([zrow, y_prev[:-1, :]], axis=0)
    next_s = jnp.concatenate([y_next[1:, :], zrow], axis=0)

    acc = (y_same
           + jnp.where(t_in == 0, 0.0, prev_s)
           + jnp.where(t_in == T - 1, 0.0, next_s)
           + b1_ref[...])
    h1 = jnp.where(acc > 0, acc, 0.1 * acc)                 # LeakyReLU(0.1)

    # 1x1 conv (C1 -> 1) as a grouped weighted sum -> (R, D) output.
    out = jnp.dot(h1, g_ref[...], preferred_element_type=jnp.float32) + b2_ref[0]
    o_ref[...] = jnp.where(out > 0, out, 0.1 * out)         # LeakyReLU(0.1)


def _pick_batch_block(B, T, target_rows=512):
    """Rows per grid step ~target_rows, grid kept >= 2 (v7x megacore)."""
    cap = max(1, min(max(B // 2, 1), max(target_rows // max(T, 1), 1)))
    for bb in range(cap, 0, -1):
        if B % bb == 0 and (bb * T) % 8 == 0:   # keep block sublane-aligned
            return bb
    return B                                     # single full-array step


def conv_feature_imputation_forward(x, prep, *, batch_block=None):
    B, T, D = x.shape
    DC1 = prep["G"].shape[0]                     # D * C1

    if batch_block is None:
        batch_block = _pick_batch_block(B, T)
    R = batch_block * T
    grid = (B // batch_block,) if batch_block != B else (1,)

    # Lane-layout plumbing only: present x / out as (B*T, D) row slabs.
    x2 = x.astype(jnp.float32).reshape(B * T, D)

    kernel = pl.pallas_call(
        functools.partial(_cfi_fused_kernel, T=T),
        out_shape=jax.ShapeDtypeStruct((B * T, D), jnp.float32),
        grid=grid,
        in_specs=[
            pl.BlockSpec((R, D), lambda b: (b, 0)),            # x rows
            pl.BlockSpec((D, 3 * DC1), lambda b: (0, 0)),      # folded W2
            pl.BlockSpec((1, 3 * DC1), lambda b: (0, 0)),      # folded hidden bias
            pl.BlockSpec((1, DC1), lambda b: (0, 0)),          # conv1 bias
            pl.BlockSpec((DC1, D), lambda b: (0, 0)),          # 1x1 conv as G
            pl.BlockSpec(memory_space=pltpu.MemorySpace.SMEM),  # scalar conv2 bias
        ],
        out_specs=pl.BlockSpec((R, D), lambda b: (b, 0)),
        compiler_params=pltpu.CompilerParams(
            dimension_semantics=("parallel",),   # megacore sharding on v7x
            vmem_limit_bytes=32 * 1024 * 1024,   # well under v7x's 64 MiB
        ),
    )
    out = kernel(x2, prep["W2"], prep["br"], prep["b1"], prep["G"], prep["b2"])
    return out.reshape(B, T, D)


# -----------------------------------------------------------------------------
# One-time (parameter-load-time) repacking: fold the masked per-feature linear
# straight through the 3x3 conv's taps (no nonlinearity in between).
# -----------------------------------------------------------------------------
def prepare_params(params):
    W = np.asarray(params["W"], np.float64)       # (D, H, D)
    b = np.asarray(params["b"], np.float64)       # (D, H)
    m = np.asarray(params["m"], np.float64)       # (D, H, D)
    cw1 = np.asarray(params["cw1"], np.float64)   # (C1, H, 3, 3)
    cb1 = np.asarray(params["cb1"], np.float64)   # (C1,)
    cw2 = np.asarray(params["cw2"], np.float64)   # (1, C1, 1, 1)
    cb2 = np.asarray(params["cb2"], np.float64)   # (1,)

    D, H, _ = W.shape
    C1 = cw1.shape[0]

    # masked per-feature linear:  hidden[t, i*H+h] = x[t] @ w_flat[:, i*H+h] + b_flat
    w_flat = np.transpose(W * m, (2, 0, 1)).reshape(D, D * H)
    b_flat = b.reshape(1, D * H)

    # 3x3 conv with the feature-axis taps + feature-axis zero padding folded
    # into block-banded matrices M[dt] (time-axis handled in-kernel by shifts):
    #   M[dt, j*H+h, i*C1+c] = sum_{di : j = i+di-1} cw1[c, h, dt, di]
    M = np.zeros((3, D * H, D * C1), np.float64)
    for dt in range(3):
        for di in range(3):
            wk = cw1[:, :, dt, di].T                           # (H, C1)
            for i in range(D):
                j = i + di - 1
                if 0 <= j < D:
                    M[dt, j * H:(j + 1) * H, i * C1:(i + 1) * C1] += wk

    # Algebraic fold: x @ W2[dt] + br[dt]  ==  hidden @ M[dt]
    W2 = np.concatenate([w_flat @ M[dt] for dt in range(3)], axis=1)  # (D, 3*D*C1)
    br = np.concatenate([b_flat @ M[dt] for dt in range(3)], axis=1)  # (1, 3*D*C1)

    b1 = np.tile(cb1, D).reshape(1, D * C1)                   # [i*C1+c] = cb1[c]

    # 1x1 conv (C1 -> 1) as a block-diagonal grouped-sum matrix
    G = np.zeros((D * C1, D), np.float64)
    w2 = cw2.reshape(C1)
    for i in range(D):
        G[i * C1:(i + 1) * C1, i] = w2
    b2 = cb2.reshape(1)

    f32 = lambda a: jnp.asarray(a, jnp.float32)
    return {"W2": f32(W2), "br": f32(br), "b1": f32(b1), "G": f32(G), "b2": f32(b2)}


# -----------------------------------------------------------------------------
# Pure-JAX reference (for correctness check), built from the raw parameters.
# -----------------------------------------------------------------------------
def reference_forward(x, params):
    Wm = params["W"] * params["m"]
    hidden = jnp.einsum("btj,ihj->btih", x, Wm) + params["b"][None, None]
    fe = hidden  # NHWC, spatial (T, D), channels H
    y = jax.lax.conv_general_dilated(
        fe, jnp.transpose(params["cw1"], (2, 3, 1, 0)),
        window_strides=(1, 1), padding="SAME",
        dimension_numbers=("NHWC", "HWIO", "NHWC"))
    y = y + params["cb1"][None, None, None, :]
    y = jnp.where(y > 0, y, 0.1 * y)
    y = jax.lax.conv_general_dilated(
        y, jnp.transpose(params["cw2"], (2, 3, 1, 0)),
        window_strides=(1, 1), padding="SAME",
        dimension_numbers=("NHWC", "HWIO", "NHWC"))
    y = y + params["cb2"][None, None, None, :]
    y = jnp.where(y > 0, y, 0.1 * y)
    return y[..., 0]


# -----------------------------------------------------------------------------
# Deterministic parameter construction (matches the PyTorch __init__ shapes).
# Only cf_conv2 is used in forward; cf_conv / cf_conv1 are dead code.
# -----------------------------------------------------------------------------
def init_params(key, input_size, hidden_size=32):
    D, H = input_size, hidden_size
    k = jax.random.split(key, 6)
    stdv = 1.0 / math.sqrt(D)

    W = jax.random.uniform(k[0], (D, H, D), jnp.float32, -stdv, stdv)
    b = jax.random.uniform(k[1], (D, H), jnp.float32, -stdv, stdv)

    m = jnp.ones((D, H, D), jnp.float32)
    eye = jnp.eye(D, dtype=jnp.float32)[:, None, :]     # (D, 1, D)
    m = m - eye                                         # m[i, :, i] = 0

    # cf_conv2: Conv2d(H, 8, 3, padding=1) ; Conv2d(8, 1, 1)
    s1 = 1.0 / math.sqrt(H * 9)
    cw1 = jax.random.uniform(k[2], (8, H, 3, 3), jnp.float32, -s1, s1)
    cb1 = jax.random.uniform(k[3], (8,), jnp.float32, -s1, s1)
    s2 = 1.0 / math.sqrt(8)
    cw2 = jax.random.uniform(k[4], (1, 8, 1, 1), jnp.float32, -s2, s2)
    cb2 = jax.random.uniform(k[5], (1,), jnp.float32, -s2, s2)

    return {"W": W, "b": b, "m": m, "cw1": cw1, "cb1": cb1,
            "cw2": cw2, "cb2": cb2}


if __name__ == "__main__":
    B, T, D, H = 8, 8, 8, 32          # num_vars=8, hidden_size=32 (module default)
    key = jax.random.PRNGKey(0)
    kx, kp = jax.random.split(key)

    params = init_params(kp, input_size=D, hidden_size=H)
    prep = prepare_params(params)                    # load-time weight folding
    x = jax.random.normal(kx, (B, T, D), jnp.float32)

    out = jax.block_until_ready(conv_feature_imputation_forward(x, prep))
    ref = jax.block_until_ready(reference_forward(x, params))

    assert out.shape == (B, T, D), out.shape
    np.testing.assert_allclose(np.asarray(out), np.asarray(ref),
                               rtol=1e-4, atol=1e-4)
    print("KERNEL_OK")
</pallas_src>

<mosaic_0001>
module attributes {stable_mosaic.version = 11 : i64} {
  func.func @_cfi_fused_kernel(%arg0: i32, %arg1: memref<32x8xf32, #tpu.memory_space<vmem>>, %arg2: memref<8x192xf32, #tpu.memory_space<vmem>>, %arg3: memref<1x192xf32, #tpu.memory_space<vmem>>, %arg4: memref<1x64xf32, #tpu.memory_space<vmem>>, %arg5: memref<64x8xf32, #tpu.memory_space<vmem>>, %arg6: memref<1xf32, #tpu.memory_space<smem>>, %arg7: memref<32x8xf32, #tpu.memory_space<vmem>>) attributes {dimension_semantics = [#tpu.dimension_semantics<parallel>], iteration_bounds = array<i64: 2>, scalar_prefetch = 0 : i64, scratch_operands = 0 : i64, tpu.core_type = #tpu.core_type<tc>, window_params = [{transform_indices = @transform_0, window_bounds = array<i64: 32, 8>}, {pipeline_mode = #tpu.pipeline_mode<synchronous>, transform_indices = @transform_1, window_bounds = array<i64: 8, 192>}, {pipeline_mode = #tpu.pipeline_mode<synchronous>, transform_indices = @transform_2, window_bounds = array<i64: 1, 192>}, {pipeline_mode = #tpu.pipeline_mode<synchronous>, transform_indices = @transform_3, window_bounds = array<i64: 1, 64>}, {pipeline_mode = #tpu.pipeline_mode<synchronous>, transform_indices = @transform_4, window_bounds = array<i64: 64, 8>}, {transform_indices = @transform_5, window_bounds = array<i64: 1>}, {transform_indices = @transform_6, window_bounds = array<i64: 32, 8>}]} {
    %c0 = arith.constant 0 : index
    %c0_0 = arith.constant 0 : index
    %0 = vector.load %arg1[%c0, %c0_0] : memref<32x8xf32, #tpu.memory_space<vmem>>, vector<32x8xf32>
    %c0_1 = arith.constant 0 : index
    %c0_2 = arith.constant 0 : index
    %1 = vector.load %arg2[%c0_1, %c0_2] : memref<8x192xf32, #tpu.memory_space<vmem>>, vector<8x192xf32>
    %cst = arith.constant dense<0.000000e+00> : vector<32x192xf32>
    %2 = tpu.matmul %0, %1, %cst {dimension_numbers = #tpu.dot_dimension_numbers<[1], [0], [0], [1], [0, 0, 1, 1], [], []>} : vector<32x8xf32>, vector<8x192xf32>, vector<32x192xf32> -> vector<32x192xf32>
    %c0_3 = arith.constant 0 : index
    %c0_4 = arith.constant 0 : index
    %3 = vector.load %arg3[%c0_3, %c0_4] : memref<1x192xf32, #tpu.memory_space<vmem>>, vector<1x192xf32>
    %4 = vector.broadcast %3 : vector<1x192xf32> to vector<32x192xf32>
    %5 = arith.addf %2, %4 : vector<32x192xf32>
    %6 = vector.extract_strided_slice %5 {offsets = [0, 0], sizes = [32, 64], strides = [1, 1]} : vector<32x192xf32> to vector<32x64xf32>
    %7 = vector.extract_strided_slice %5 {offsets = [0, 64], sizes = [32, 64], strides = [1, 1]} : vector<32x192xf32> to vector<32x64xf32>
    %8 = vector.extract_strided_slice %5 {offsets = [0, 128], sizes = [32, 64], strides = [1, 1]} : vector<32x192xf32> to vector<32x64xf32>
    %9 = tpu.iota {dimensions = array<i32: 0>} : vector<32x64xi32>
    %c8_i32 = arith.constant 8 : i32
    %c0_i32 = arith.constant 0 : i32
    %10 = arith.cmpi eq, %c8_i32, %c0_i32 : i32
    %c1_i32 = arith.constant 1 : i32
    %11 = arith.select %10, %c1_i32, %c8_i32 : i32
    %12 = vector.broadcast %11 : i32 to vector<32x64xi32>
    %13 = arith.remsi %9, %12 : vector<32x64xi32>
    %c0_i32_5 = arith.constant 0 : i32
    %14 = vector.broadcast %c0_i32_5 : i32 to vector<32x64xi32>
    %15 = arith.cmpi ne, %13, %14 : vector<32x64xi32>
    %c0_i32_6 = arith.constant 0 : i32
    %16 = vector.broadcast %c0_i32_6 : i32 to vector<32x64xi32>
    %17 = arith.cmpi slt, %13, %16 : vector<32x64xi32>
    %c0_i32_7 = arith.constant 0 : i32
    %18 = arith.cmpi slt, %11, %c0_i32_7 : i32
    %19 = vector.broadcast %18 : i1 to vector<32x64xi1>
    %20 = vector.broadcast %19 : vector<32x64xi1> to vector<32x64xi1>
    %21 = arith.xori %17, %20 : vector<32x64xi1>
    %22 = arith.andi %21, %15 : vector<32x64xi1>
    %23 = vector.broadcast %11 : i32 to vector<32x64xi32>
    %24 = arith.addi %13, %23 : vector<32x64xi32>
    %25 = arith.select %22, %24, %13 : vector<32x64xi1>, vector<32x64xi32>
    %cst_8 = arith.constant 0.000000e+00 : f32
    %26 = vector.broadcast %cst_8 : f32 to vector<1x64xf32>
    %27 = vector.extract_strided_slice %6 {offsets = [0, 0], sizes = [31, 64], strides = [1, 1]} : vector<32x64xf32> to vector<31x64xf32>
    %28 = tpu.concatenate %26, %27 in 0 : vector<1x64xf32>, vector<31x64xf32> -> vector<32x64xf32>
    %29 = vector.extract_strided_slice %8 {offsets = [1, 0], sizes = [31, 64], strides = [1, 1]} : vector<32x64xf32> to vector<31x64xf32>
    %30 = tpu.concatenate %29, %26 in 0 : vector<31x64xf32>, vector<1x64xf32> -> vector<32x64xf32>
    %c0_i32_9 = arith.constant 0 : i32
    %31 = vector.broadcast %c0_i32_9 : i32 to vector<32x64xi32>
    %32 = arith.cmpi eq, %25, %31 : vector<32x64xi32>
    %cst_10 = arith.constant 0.000000e+00 : f32
    %33 = vector.broadcast %cst_10 : f32 to vector<32x64xf32>
    %34 = arith.select %32, %33, %28 : vector<32x64xi1>, vector<32x64xf32>
    %35 = arith.addf %7, %34 : vector<32x64xf32>
    %c7_i32 = arith.constant 7 : i32
    %36 = vector.broadcast %c7_i32 : i32 to vector<32x64xi32>
    %37 = arith.cmpi eq, %25, %36 : vector<32x64xi32>
    %cst_11 = arith.constant 0.000000e+00 : f32
    %38 = vector.broadcast %cst_11 : f32 to vector<32x64xf32>
    %39 = arith.select %37, %38, %30 : vector<32x64xi1>, vector<32x64xf32>
    %40 = arith.addf %35, %39 : vector<32x64xf32>
    %c0_12 = arith.constant 0 : index
    %c0_13 = arith.constant 0 : index
    %41 = vector.load %arg4[%c0_12, %c0_13] : memref<1x64xf32, #tpu.memory_space<vmem>>, vector<1x64xf32>
    %42 = vector.broadcast %41 : vector<1x64xf32> to vector<32x64xf32>
    %43 = arith.addf %40, %42 : vector<32x64xf32>
    %cst_14 = arith.constant 0.000000e+00 : f32
    %44 = vector.broadcast %cst_14 : f32 to vector<32x64xf32>
    %45 = arith.cmpf ogt, %43, %44 : vector<32x64xf32>
    %cst_15 = arith.constant 1.000000e-01 : f32
    %46 = vector.broadcast %cst_15 : f32 to vector<32x64xf32>
    %47 = arith.mulf %46, %43 : vector<32x64xf32>
    %48 = arith.select %45, %43, %47 : vector<32x64xi1>, vector<32x64xf32>
    %c0_16 = arith.constant 0 : index
    %c0_17 = arith.constant 0 : index
    %49 = vector.load %arg5[%c0_16, %c0_17] : memref<64x8xf32, #tpu.memory_space<vmem>>, vector<64x8xf32>
    %cst_18 = arith.constant dense<0.000000e+00> : vector<32x8xf32>
    %50 = tpu.matmul %48, %49, %cst_18 {dimension_numbers = #tpu.dot_dimension_numbers<[1], [0], [0], [1], [0, 0, 1, 1], [], []>} : vector<32x64xf32>, vector<64x8xf32>, vector<32x8xf32> -> vector<32x8xf32>
    %c0_19 = arith.constant 0 : index
    %51 = memref.load %arg6[%c0_19] : memref<1xf32, #tpu.memory_space<smem>>
    %52 = vector.broadcast %51 : f32 to vector<32x8xf32>
    %53 = arith.addf %50, %52 : vector<32x8xf32>
    %cst_20 = arith.constant 0.000000e+00 : f32
    %54 = vector.broadcast %cst_20 : f32 to vector<32x8xf32>
    %55 = arith.cmpf ogt, %53, %54 : vector<32x8xf32>
    %cst_21 = arith.constant 1.000000e-01 : f32
    %56 = vector.broadcast %cst_21 : f32 to vector<32x8xf32>
    %57 = arith.mulf %56, %53 : vector<32x8xf32>
    %58 = arith.select %55, %53, %57 : vector<32x8xi1>, vector<32x8xf32>
    %c0_22 = arith.constant 0 : index
    %c0_23 = arith.constant 0 : index
    %59 = vector.load %arg7[%c0_22, %c0_23] : memref<32x8xf32, #tpu.memory_space<vmem>>, vector<32x8xf32>
    tpu.vector_store %arg7[%c0_22, %c0_23], %58 {strides = array<i32>} : memref<32x8xf32, #tpu.memory_space<vmem>>, vector<32x8xf32>,
    return
  }
  func.func @transform_0(%arg0: i32) -> (i32, i32) {
    %c0_i32 = arith.constant 0 : i32
    %c0_i32_0 = arith.constant 0 : i32
    return %arg0, %c0_i32 : i32, i32
  }
  func.func @transform_1(%arg0: i32) -> (i32, i32) {
    %c0_i32 = arith.constant 0 : i32
    %c0_i32_0 = arith.constant 0 : i32
    %c0_i32_1 = arith.constant 0 : i32
    return %c0_i32, %c0_i32_0 : i32, i32
  }
  func.func @transform_2(%arg0: i32) -> (i32, i32) {
    %c0_i32 = arith.constant 0 : i32
    %c0_i32_0 = arith.constant 0 : i32
    %c0_i32_1 = arith.constant 0 : i32
    return %c0_i32, %c0_i32_0 : i32, i32
  }
  func.func @transform_3(%arg0: i32) -> (i32, i32) {
    %c0_i32 = arith.constant 0 : i32
    %c0_i32_0 = arith.constant 0 : i32
    %c0_i32_1 = arith.constant 0 : i32
    return %c0_i32, %c0_i32_0 : i32, i32
  }
  func.func @transform_4(%arg0: i32) -> (i32, i32) {
    %c0_i32 = arith.constant 0 : i32
    %c0_i32_0 = arith.constant 0 : i32
    %c0_i32_1 = arith.constant 0 : i32
    return %c0_i32, %c0_i32_0 : i32, i32
  }
  func.func @transform_5(%arg0: i32) -> i32 {
    %c0_i32 = arith.constant 0 : i32
    %c0_i32_0 = arith.constant 0 : i32
    return %c0_i32 : i32
  }
  func.func @transform_6(%arg0: i32) -> (i32, i32) {
    %c0_i32 = arith.constant 0 : i32
    %c0_i32_0 = arith.constant 0 : i32
    return %arg0, %c0_i32 : i32, i32
  }
}

</mosaic_0001>

<llo_original>
// kernel: tpu_custom_call.1
$region0: #{tpu_custom_call.1}
  #allocation0 [shape = 'u32[]', space=smem, size = 0x4, offset = 0x4, fixed_abs, tag = 'smem constant byte address 0x4 - core index']
  #allocation1 [shape = 'u32[72,128]{1,0:T(1,128)}', space=vmem, size = 0x9000, scoped, tag = 'internal scratch']
  #allocation2 [shape = 'f32[1]{0:T(128)S(6)}', space=smem, size = 0x200, scoped, tag = 'scoped memory for tpu_custom_call.1']
  %s0 = inlined_call_operand.vmem [shape: f32[64,8], index: 0, kind: input, shape index: {}]
  %s1 = inlined_call_operand.vmem [shape: f32[8,192], index: 1, kind: input, shape index: {}]
  %s2 = inlined_call_operand.vmem [shape: f32[1,192], index: 2, kind: input, shape index: {}]
  %s3 = inlined_call_operand.vmem [shape: f32[1,64], index: 3, kind: input, shape index: {}]
  %s4 = inlined_call_operand.vmem [shape: f32[64,8], index: 4, kind: input, shape index: {}]
  %s5 = inlined_call_operand.<no memory space> [shape: f32[1], index: 5, kind: input, shape index: {}]
  %s6 = inlined_call_operand.vmem [shape: f32[64,8], index: 6, kind: output, shape index: {}]
  %s7 = sld [smem:[#allocation0]]
  $region57: #{tpu_custom_call.1} parent=0
    _
  %s9 = ssub.s32 1, %s7
  %s10 = scalar_select 0, %s9, %s7
  %11 = sst [smem:[#allocation2]] %s5
  loop: start=0, step=1, limit=4
  $region2: #{tpu_custom_call.1} parent=0 // loop_pre_header
    _
  $region3: #{tpu_custom_call.1} parent=0 // loop_header
    %s13 = sphi 0, %s17
    %p14 = scmp.ge.s32.totalorder %s13, 4
    %s23 = sphi 0, %s25
    %s26 = sphi 0, %s23
    %s27 = sphi 0, %s26
    %s43 = sphi 0, %s27
    %s47 = sphi 0, %s47
    %s49 = sphi 0, %s47
    %s50 = sphi 0, %s49
    %s64 = sphi 0, %s50
    %s68 = sphi 0, %s68
    %s70 = sphi 0, %s68
    %s71 = sphi 0, %s70
    %s85 = sphi 0, %s71
    %s89 = sphi 0, %s89
    %s91 = sphi 0, %s89
    %s92 = sphi 0, %s91
    %s106 = sphi 0, %s92
    %s110 = sphi 0, %s110
    %s112 = sphi 0, %s110
    %s113 = sphi 0, %s112
    %s127 = sphi 0, %s113
    %s131 = sphi 0, %s131
    %s133 = sphi 0, %s131
    %s134 = sphi 0, %s133
    %s148 = sphi 0, %s134
    %s154 = sphi 0, %s156
    %s157 = sphi 0, %s154
    %s158 = sphi 0, %s157
    %s174 = sphi 0, %s158
  $region4: #{tpu_custom_call.1} parent=0 // loop_header_branch
    %16 = sbr.rel (%p14) target = $region8
  $region5: #{tpu_custom_call.1} parent=0 // loop_body
    %s18 = ssub.s32 %s13, 1
    %s19 = ssub.s32 %s13, 2
    %s20 = sadd.s32 %s13, 1
    %s21 = ssub.s32 %s13, %s20
    %p22 = scmp.eq.s32.totalorder %s21, 0
    %s24 = sadd.s32 %s23, 1
    %s25 = scalar_select %p22, %s23, %s24
    %p28 = pneg %p22
    %p29 = scmp.eq.s32.totalorder %s13, 1
    %p30 = por %p28, %p29
    %p31 = scmp.ne.s32.totalorder %s23, %s26
    %p32 = scmp.eq.s32.totalorder %s13, 0
    %p33 = por %p31, %p32
    %p34 = scmp.ne.s32.totalorder %s23, %s26
    %p35 = scmp.eq.s32.totalorder %s18, 1
    %p36 = por %p34, %p35
    %p37 = scmp.ne.s32.totalorder %s26, %s27
    %p38 = scmp.eq.s32.totalorder %s18, 0
    %p39 = por %p37, %p38
    %p40 = scmp.ne.s32.totalorder %s26, %s27
    %p41 = scmp.eq.s32.totalorder %s19, 1
    %p42 = por %p40, %p41
    %p44 = scmp.ne.s32.totalorder %s27, %s43
    %p45 = scmp.eq.s32.totalorder %s19, 0
    %p46 = por %p44, %p45
    %s48 = sadd.s32 %s47, 1
    %p51 = scmp.eq.s32.totalorder %s13, 1
    %p52 = scmp.ne.s32.totalorder %s47, %s49
    %p53 = scmp.eq.s32.totalorder %s13, 0
    %p54 = por %p52, %p53
    %p55 = scmp.ne.s32.totalorder %s47, %s49
    %p56 = scmp.eq.s32.totalorder %s18, 1
    %p57 = por %p55, %p56
    %p58 = scmp.ne.s32.totalorder %s49, %s50
    %p59 = scmp.eq.s32.totalorder %s18, 0
    %p60 = por %p58, %p59
    %p61 = scmp.ne.s32.totalorder %s49, %s50
    %p62 = scmp.eq.s32.totalorder %s19, 1
    %p63 = por %p61, %p62
    %p65 = scmp.ne.s32.totalorder %s50, %s64
    %p66 = scmp.eq.s32.totalorder %s19, 0
    %p67 = por %p65, %p66
    %s69 = sadd.s32 %s68, 1
    %p72 = scmp.eq.s32.totalorder %s13, 1
    %p73 = scmp.ne.s32.totalorder %s68, %s70
    %p74 = scmp.eq.s32.totalorder %s13, 0
    %p75 = por %p73, %p74
    %p76 = scmp.ne.s32.totalorder %s68, %s70
    %p77 = scmp.eq.s32.totalorder %s18, 1
    %p78 = por %p76, %p77
    %p79 = scmp.ne.s32.totalorder %s70, %s71
    %p80 = scmp.eq.s32.totalorder %s18, 0
    %p81 = por %p79, %p80
    %p82 = scmp.ne.s32.totalorder %s70, %s71
    %p83 = scmp.eq.s32.totalorder %s19, 1
    %p84 = por %p82, %p83
    %p86 = scmp.ne.s32.totalorder %s71, %s85
    %p87 = scmp.eq.s32.totalorder %s19, 0
    %p88 = por %p86, %p87
    %s90 = sadd.s32 %s89, 1
    %p93 = scmp.eq.s32.totalorder %s13, 1
    %p94 = scmp.ne.s32.totalorder %s89, %s91
    %p95 = scmp.eq.s32.totalorder %s13, 0
    %p96 = por %p94, %p95
    %p97 = scmp.ne.s32.totalorder %s89, %s91
    %p98 = scmp.eq.s32.totalorder %s18, 1
    %p99 = por %p97, %p98
    %p100 = scmp.ne.s32.totalorder %s91, %s92
    %p101 = scmp.eq.s32.totalorder %s18, 0
    %p102 = por %p100, %p101
    %p103 = scmp.ne.s32.totalorder %s91, %s92
    %p104 = scmp.eq.s32.totalorder %s19, 1
    %p105 = por %p103, %p104
    %p107 = scmp.ne.s32.totalorder %s92, %s106
    %p108 = scmp.eq.s32.totalorder %s19, 0
    %p109 = por %p107, %p108
    %s111 = sadd.s32 %s110, 1
    %p114 = scmp.eq.s32.totalorder %s13, 1
    %p115 = scmp.ne.s32.totalorder %s110, %s112
    %p116 = scmp.eq.s32.totalorder %s13, 0
    %p117 = por %p115, %p116
    %p118 = scmp.ne.s32.totalorder %s110, %s112
    %p119 = scmp.eq.s32.totalorder %s18, 1
    %p120 = por %p118, %p119
    %p121 = scmp.ne.s32.totalorder %s112, %s113
    %p122 = scmp.eq.s32.totalorder %s18, 0
    %p123 = por %p121, %p122
    %p124 = scmp.ne.s32.totalorder %s112, %s113
    %p125 = scmp.eq.s32.totalorder %s19, 1
    %p126 = por %p124, %p125
    %p128 = scmp.ne.s32.totalorder %s113, %s127
    %p129 = scmp.eq.s32.totalorder %s19, 0
    %p130 = por %p128, %p129
    %s132 = sadd.s32 %s131, 1
    %p135 = scmp.eq.s32.totalorder %s13, 1
    %p136 = scmp.ne.s32.totalorder %s131, %s133
    %p137 = scmp.eq.s32.totalorder %s13, 0
    %p138 = por %p136, %p137
    %p139 = scmp.ne.s32.totalorder %s131, %s133
    %p140 = scmp.eq.s32.totalorder %s18, 1
    %p141 = por %p139, %p140
    %p142 = scmp.ne.s32.totalorder %s133, %s134
    %p143 = scmp.eq.s32.totalorder %s18, 0
    %p144 = por %p142, %p143
    %p145 = scmp.ne.s32.totalorder %s133, %s134
    %p146 = scmp.eq.s32.totalorder %s19, 1
    %p147 = por %p145, %p146
    %p149 = scmp.ne.s32.totalorder %s134, %s148
    %p150 = scmp.eq.s32.totalorder %s19, 0
    %p151 = por %p149, %p150
    %s152 = ssub.s32 %s13, %s20
    %p153 = scmp.eq.s32.totalorder %s152, 0
    %s155 = sadd.s32 %s154, 1
    %s156 = scalar_select %p153, %s154, %s155
    %p159 = pneg %p153
    %p160 = scmp.eq.s32.totalorder %s13, 1
    %p161 = por %p159, %p160
    %p162 = scmp.ne.s32.totalorder %s154, %s157
    %p163 = scmp.eq.s32.totalorder %s13, 0
    %p164 = por %p162, %p163
    %p165 = scmp.ne.s32.totalorder %s154, %s157
    %p166 = scmp.eq.s32.totalorder %s18, 1
    %p167 = por %p165, %p166
    %p168 = scmp.ne.s32.totalorder %s157, %s158
    %p169 = scmp.eq.s32.totalorder %s18, 0
    %p170 = por %p168, %p169
    %p171 = scmp.ne.s32.totalorder %s157, %s158
    %p172 = scmp.eq.s32.totalorder %s19, 1
    %p173 = por %p171, %p172
    %p175 = scmp.ne.s32.totalorder %s158, %s174
    %p176 = scmp.eq.s32.totalorder %s19, 0
    %p177 = por %p175, %p176
    %p178 = scmp.le.s32.totalorder 1, %s13
    %p179 = scmp.lt.s32.totalorder %s13, 3
    %p180 = pnand %p178, %p179
    %p181 = pneg %p180
    // Predicated region
    $region9: #{tpu_custom_call.1} parent=5 // pred_check
      _
    $region10: #{tpu_custom_call.1} parent=5 // pred_check_branch
      %183 = sbr.rel (%p180) target = $region12
    $region11: #{tpu_custom_call.1} parent=5 // pred_region
      %s184 = ssub.s32 %s13, 1
      // Predicated region
      $region13: #{tpu_custom_call.1} parent=11 // pred_check
        %p185 = pneg %p60
      $region14: #{tpu_custom_call.1} parent=11 // pred_check_branch
        %187 = sbr.rel (%p185) target = $region16
      $region15: #{tpu_custom_call.1} parent=11 // pred_region
        _
      $region16: #{tpu_custom_call.1} parent=11 // pred_fallthru
        _
      // Predicated region
      $region17: #{tpu_custom_call.1} parent=11 // pred_check
        %p188 = pneg %p81
      $region18: #{tpu_custom_call.1} parent=11 // pred_check_branch
        %190 = sbr.rel (%p188) target = $region20
      $region19: #{tpu_custom_call.1} parent=11 // pred_region
        _
      $region20: #{tpu_custom_call.1} parent=11 // pred_fallthru
        _
      // Predicated region
      $region21: #{tpu_custom_call.1} parent=11 // pred_check
        %p191 = pneg %p102
      $region22: #{tpu_custom_call.1} parent=11 // pred_check_branch
        %193 = sbr.rel (%p191) target = $region24
      $region23: #{tpu_custom_call.1} parent=11 // pred_region
        _
      $region24: #{tpu_custom_call.1} parent=11 // pred_fallthru
        _
      // Predicated region
      $region25: #{tpu_custom_call.1} parent=11 // pred_check
        %p194 = pneg %p123
      $region26: #{tpu_custom_call.1} parent=11 // pred_check_branch
        %196 = sbr.rel (%p194) target = $region28
      $region27: #{tpu_custom_call.1} parent=11 // pred_region
        _
      $region28: #{tpu_custom_call.1} parent=11 // pred_fallthru
        _
      // Predicated region
      $region29: #{tpu_custom_call.1} parent=11 // pred_check
        %p197 = pneg %p144
      $region30: #{tpu_custom_call.1} parent=11 // pred_check_branch
        %199 = sbr.rel (%p197) target = $region32
      $region31: #{tpu_custom_call.1} parent=11 // pred_region
        _
      $region32: #{tpu_custom_call.1} parent=11 // pred_fallthru
        _
    $region12: #{tpu_custom_call.1} parent=5 // pred_fallthru
      _
    %p200 = scmp.lt.s32.totalorder %s13, 2
    // Predicated region
    $region33: #{tpu_custom_call.1} parent=5 // pred_check
      %p201 = pneg %p200
    $region34: #{tpu_custom_call.1} parent=5 // pred_check_branch
      %203 = sbr.rel (%p201) target = $region36
    $region35: #{tpu_custom_call.1} parent=5 // pred_region
      // Predicated region
      $region37: #{tpu_custom_call.1} parent=35 // pred_check
        %p204 = pneg %p33
      $region38: #{tpu_custom_call.1} parent=35 // pred_check_branch
        %206 = sbr.rel (%p204) target = $region40
      $region39: #{tpu_custom_call.1} parent=35 // pred_region
        %s207 = smul.u32 4, %s13
        %p208 = scmp.lt.s32.totalorder %s207, 7
        %s209 = scalar_select %p208, %s207, 7
        %s210 = smul.addr %s209, 8
        %s211 = scalar_lea.vmem %s0, %s210
        %s212 = smul.u32 4, %s13
      $region40: #{tpu_custom_call.1} parent=35 // pred_fallthru
        _
    $region36: #{tpu_custom_call.1} parent=5 // pred_fallthru
      _
    %p213 = scmp.le.s32.totalorder 1, %s13
    %p214 = scmp.lt.s32.totalorder %s13, 3
    %p215 = pnand %p213, %p214
    %p216 = pneg %p215
    // Predicated region
    $region41: #{tpu_custom_call.1} parent=5 // pred_check
      _
    $region42: #{tpu_custom_call.1} parent=5 // pred_check_branch
      %218 = sbr.rel (%p215) target = $region44
    $region43: #{tpu_custom_call.1} parent=5 // pred_region
      %s219 = ssub.s32 %s13, 1
      %s220 = smul.u32 4, %s18
      %p221 = scmp.lt.s32.totalorder %s220, 7
      %s222 = scalar_select %p221, %s220, 7
      %s223 = smul.addr %s222, 8
      %s224 = scalar_lea.vmem %s0, %s223
      %p225 = pneg %p39
      %p226 = pneg %p36
      %p227 = pneg %p60
      %p228 = pneg %p57
      %p229 = pneg %p81
      %p230 = pneg %p78
      %p231 = pneg %p102
      %p232 = pneg %p99
      %p233 = pneg %p123
      %p234 = pneg %p120
      %p235 = pneg %p144
      %p236 = pneg %p141
      %p237 = pneg %p170
      %p238 = pneg %p167
      %s239 = smul.u32 4, %s18
      %p240 = scmp.lt.s32.totalorder %s239, 7
      %s241 = scalar_select %p240, %s239, 7
      %s242 = smul.addr %s241, 8
      %s243 = scalar_lea.vmem %s6, %s242
      %s244 = smul.u32 4, %s18
      %p245 = scmp.lt.s32.totalorder %s244, 7
      %s246 = scalar_select %p245, %s244, 7
      %s247 = smul.addr %s246, 8
      %s248 = scalar_lea.vmem %s0, %s247
      %s249 = smul.u32 4, %s18
      %s250 = smul.u32 4, %s18
      %p251 = scmp.lt.s32.totalorder %s250, 7
      %s252 = scalar_select %p251, %s250, 7
      %s253 = smul.addr %s252, 8
      %s254 = scalar_lea.vmem %s6, %s253
      %s255 = smul.u32 4, %s18
      %v256 = vld [vmem:[%s248] sm:$0xff]
      %v257 = vld [vmem:[%s248 + $0x8] sm:$0xff]
      %v258 = vld [vmem:[%s248 + $0x10] sm:$0xff]
      %v259 = vld [vmem:[%s248 + $0x18] sm:$0xff]
      %v260 = vld [vmem:[%s1] sm:$0xff]
      %v261 = vld [vmem:[%s1 + $0x8] sm:$0xff]
      %v262 = vld [vmem:[%s2] sm:$0x3]
      %v264 = vperm.slane %v262, 0
      %v265 = vperm.slane %v262, 1
      %vm268 = vcmask 64512
      %v270 = vsel %vm268, %v256, 0
      %v273 = vsel %vm268, %v257, 0
      %v276 = vsel %vm268, %v258, 0
      %v279 = vsel %vm268, %v259, 0
      %281 = vmatpush.msra.mxu0 0.0
      %282 = vmatpush.msra.mxu0 0.0
      %283 = vmatpush.msra.mxu0 0.0
      %284 = vmatpush.msra.mxu0 0.0
      %285 = vmatpush.msra.mxu0 0.0
      %286 = vmatpush.msra.mxu0 0.0
      %287 = vmatpush.msra.mxu0 0.0
      %288 = vmatpush.msra.mxu0 0.0
      %289 = vmatpush.msra.mxu0 0.0
      %290 = vmatpush.msra.mxu0 0.0
      %291 = vmatpush.msra.mxu0 0.0
      %292 = vmatpush.msra.mxu0 0.0
      %293 = vmatpush.msra.mxu0 0.0
      %294 = vmatpush.msra.mxu0 0.0
      %295 = vmatpush.msra.mxu0 0.0
      %296 = vmatpush.msra.mxu0 %v260
      %297 = vmatmul.f32.gmra.mxu0 %v270
      %v298 = vpop.f32.mrf.mxu0
      %v299 = vadd.f32 %v264, %v298
      %300 = vmatmul.f32.gmra.mxu0 %v273
      %v301 = vpop.f32.mrf.mxu0
      %v302 = vadd.f32 %v264, %v301
      %303 = vmatmul.f32.gmra.mxu0 %v276
      %v304 = vpop.f32.mrf.mxu0
      %v305 = vadd.f32 %v264, %v304
      %306 = vmatmul.f32.gmra.mxu0 %v279
      %v307 = vpop.f32.mrf.mxu0
      %v308 = vadd.f32 %v264, %v307
      %309 = vdwg.mxu0
      %310 = vmatpush.msra.mxu0 0.0
      %311 = vmatpush.msra.mxu0 0.0
      %312 = vmatpush.msra.mxu0 0.0
      %313 = vmatpush.msra.mxu0 0.0
      %314 = vmatpush.msra.mxu0 0.0
      %315 = vmatpush.msra.mxu0 0.0
      %316 = vmatpush.msra.mxu0 0.0
      %317 = vmatpush.msra.mxu0 0.0
      %318 = vmatpush.msra.mxu0 0.0
      %319 = vmatpush.msra.mxu0 0.0
      %320 = vmatpush.msra.mxu0 0.0
      %321 = vmatpush.msra.mxu0 0.0
      %322 = vmatpush.msra.mxu0 0.0
      %323 = vmatpush.msra.mxu0 0.0
      %324 = vmatpush.msra.mxu0 0.0
      %325 = vmatpush.msra.mxu0 %v261
      %326 = vmatmul.f32.gmra.mxu0 %v270
      %v327 = vpop.f32.mrf.mxu0
      %v328 = vadd.f32 %v265, %v327
      %329 = vmatmul.f32.gmra.mxu0 %v273
      %v330 = vpop.f32.mrf.mxu0
      %v331 = vadd.f32 %v265, %v330
      %332 = vmatmul.f32.gmra.mxu0 %v276
      %v333 = vpop.f32.mrf.mxu0
      %v334 = vadd.f32 %v265, %v333
      %335 = vmatmul.f32.gmra.mxu0 %v279
      %v336 = vpop.f32.mrf.mxu0
      %v337 = vadd.f32 %v265, %v336
      %338 = vdwg.mxu0
      %v339 = vlaneseq
      %v340 = vshrl.u32 %v339, 7
      %v341 = vadd.s32 %v340, 8
      %v342 = vadd.s32 %v340, 16
      %v343 = vadd.s32 %v340, 24
      %vm344 = vcmp.lt.s32.totalorder %v340, 0
      %v345 = vsub.s32 0, %v340
      %v346 = vsel %vm344, %v345, %v340
      %v347 = vshrl.u32 %v346, 3
      %v348 = vand.u32 %v346, 7
      %v349 = vsub.s32 0, %v348
      %v350 = vsel %vm344, %v349, %v348
      %vm351 = vcmp.lt.s32.totalorder %v341, 0
      %v352 = vsub.s32 0, %v341
      %v353 = vsel %vm351, %v352, %v341
      %v354 = vshrl.u32 %v353, 3
      %v355 = vand.u32 %v353, 7
      %v356 = vsub.s32 0, %v355
      %v357 = vsel %vm351, %v356, %v355
      %vm358 = vcmp.lt.s32.totalorder %v342, 0
      %v359 = vsub.s32 0, %v342
      %v360 = vsel %vm358, %v359, %v342
      %v361 = vshrl.u32 %v360, 3
      %v362 = vand.u32 %v360, 7
      %v363 = vsub.s32 0, %v362
      %v364 = vsel %vm358, %v363, %v362
      %vm365 = vcmp.lt.s32.totalorder %v343, 0
      %v366 = vsub.s32 0, %v343
      %v367 = vsel %vm365, %v366, %v343
      %v368 = vshrl.u32 %v367, 3
      %v369 = vand.u32 %v367, 7
      %v370 = vsub.s32 0, %v369
      %v371 = vsel %vm365, %v370, %v369
      %vm372 = vcmp.ne.s32.totalorder %v350, 0
      %vm373 = vcmp.ne.s32.totalorder %v357, 0
      %vm374 = vcmp.ne.s32.totalorder %v364, 0
      %vm375 = vcmp.ne.s32.totalorder %v371, 0
      %vm376 = vcmp.lt.s32.totalorder %v350, 0
      %vm377 = vcmp.lt.s32.totalorder %v357, 0
      %vm378 = vcmp.lt.s32.totalorder %v364, 0
      %vm379 = vcmp.lt.s32.totalorder %v371, 0
      %vm380 = vmand %vm376, %vm372
      %vm381 = vmand %vm377, %vm373
      %vm382 = vmand %vm378, %vm374
      %vm383 = vmand %vm379, %vm375
      %v384 = vadd.s32 %v350, 8
      %v385 = vadd.s32 %v357, 8
      %v386 = vadd.s32 %v364, 8
      %v387 = vadd.s32 %v371, 8
      %v388 = vsel %vm380, %v384, %v350
      %v389 = vsel %vm381, %v385, %v357
      %v390 = vsel %vm382, %v386, %v364
      %v391 = vsel %vm383, %v387, %v371
      %vm396 = vcmask 1040384
      %v397 = vrot.slane %v299, 7
      %v398 = vrot.slane %v302, 7
      %v399 = vsel %vm396, %v397, %v398
      %v400 = vrot.slane %v305, 7
      %v401 = vsel %vm396, %v398, %v400
      %v402 = vrot.slane %v308, 7
      %v403 = vsel %vm396, %v400, %v402
      %v408 = vsel %vm396, 0.0, %v397
      %vm413 = vcmask 1046528
      %v414 = vrot.slane %v328, 1
      %v415 = vrot.slane %v331, 1
      %v416 = vsel %vm413, %v414, %v415
      %v417 = vrot.slane %v334, 1
      %v418 = vsel %vm413, %v415, %v417
      %v419 = vrot.slane %v337, 1
      %v420 = vsel %vm413, %v417, %v419
      %v425 = vsel %vm413, %v419, 0.0
      %vm426 = vcmp.eq.s32.totalorder %v388, 0
      %vm427 = vcmp.eq.s32.totalorder %v389, 0
      %vm428 = vcmp.eq.s32.totalorder %v390, 0
      %vm429 = vcmp.eq.s32.totalorder %v391, 0
      %v430 = vsel %vm426, 0.0, %v408
      %v431 = vsel %vm427, 0.0, %v399
      %v432 = vsel %vm428, 0.0, %v401
      %v433 = vsel %vm429, 0.0, %v403
      %438 = vrot.lane.b32.xlu0 %v430, 64
      %v439 = vpop.permute.xlu0 %438
      %440 = vrot.lane.b32.xlu0 %v431, 64
      %v441 = vpop.permute.xlu0 %440
      %442 = vrot.lane.b32.xlu0 %v432, 64
      %v443 = vpop.permute.xlu0 %442
      %444 = vrot.lane.b32.xlu0 %v433, 64
      %v445 = vpop.permute.xlu0 %444
      %v450 = vadd.f32 %v299, %v439
      %v451 = vadd.f32 %v302, %v441
      %v452 = vadd.f32 %v305, %v443
      %v453 = vadd.f32 %v308, %v445
      %vm454 = vcmp.eq.s32.totalorder %v388, 7
      %vm455 = vcmp.eq.s32.totalorder %v389, 7
      %vm456 = vcmp.eq.s32.totalorder %v390, 7
      %vm457 = vcmp.eq.s32.totalorder %v391, 7
      %v458 = vsel %vm454, 0.0, %v416
      %v459 = vsel %vm455, 0.0, %v418
      %v460 = vsel %vm456, 0.0, %v420
      %v461 = vsel %vm457, 0.0, %v425
      %466 = vrot.lane.b32.xlu0 %v458, 64
      %v467 = vpop.permute.xlu0 %466
      %468 = vrot.lane.b32.xlu0 %v459, 64
      %v469 = vpop.permute.xlu0 %468
      %470 = vrot.lane.b32.xlu0 %v460, 64
      %v471 = vpop.permute.xlu0 %470
      %472 = vrot.lane.b32.xlu0 %v461, 64
      %v473 = vpop.permute.xlu0 %472
      %v478 = vadd.f32 %v450, %v467
      %v479 = vadd.f32 %v451, %v469
      %v480 = vadd.f32 %v452, %v471
      %v481 = vadd.f32 %v453, %v473
      %v482 = vld [vmem:[%s3] sm:$0x1]
      %v484 = vperm.slane %v482, 0
      %485 = vrot.lane.b32.xlu0 %v484, 64
      %v486 = vpop.permute.xlu0 %485
      %v488 = vadd.f32 %v478, %v486
      %v489 = vadd.f32 %v479, %v486
      %v490 = vadd.f32 %v480, %v486
      %v491 = vadd.f32 %v481, %v486
      %vm492 = vcmp.gt.f32.partialorder %v488, 0.0
      %vm493 = vcmp.gt.f32.partialorder %v489, 0.0
      %vm494 = vcmp.gt.f32.partialorder %v490, 0.0
      %vm495 = vcmp.gt.f32.partialorder %v491, 0.0
      %v496 = vmul.f32 %v488, 0.1
      %v497 = vmul.f32 %v489, 0.1
      %v498 = vmul.f32 %v490, 0.1
      %v499 = vmul.f32 %v491, 0.1
      %v500 = vsel %vm492, %v488, %v496
      %v501 = vsel %vm493, %v489, %v497
      %v502 = vsel %vm494, %v490, %v498
      %v503 = vsel %vm495, %v491, %v499
      %v504 = vld [vmem:[%s4] sm:$0xff]
      %v505 = vld [vmem:[%s4 + $0x8] sm:$0xff]
      %v506 = vld [vmem:[%s4 + $0x10] sm:$0xff]
      %v507 = vld [vmem:[%s4 + $0x18] sm:$0xff]
      %v508 = vld [vmem:[%s4 + $0x20] sm:$0xff]
      %v509 = vld [vmem:[%s4 + $0x28] sm:$0xff]
      %v510 = vld [vmem:[%s4 + $0x30] sm:$0xff]
      %v511 = vld [vmem:[%s4 + $0x38] sm:$0xff]
      %s512 = sld [smem:[#allocation2]]
      %v513 = vstv %s512
      %518 = vrot.lane.b32.xlu0 %v500, 64
      %v519 = vpop.permute.xlu0 %518
      %520 = vrot.lane.b32.xlu0 %v501, 64
      %v521 = vpop.permute.xlu0 %520
      %522 = vrot.lane.b32.xlu0 %v502, 64
      %v523 = vpop.permute.xlu0 %522
      %524 = vrot.lane.b32.xlu0 %v503, 64
      %v525 = vpop.permute.xlu0 %524
      %vm526 = vcmask 523264
      %v527 = vsel %vm526, %v519, 0
      %v529 = vsel %vm526, %v521, 0
      %v531 = vsel %vm526, %v523, 0
      %v533 = vsel %vm526, %v525, 0
      %535 = vmatpush.msra.mxu0 0.0
      %536 = vmatpush.msra.mxu0 0.0
      %537 = vmatpush.msra.mxu0 0.0
      %538 = vmatpush.msra.mxu0 0.0
      %539 = vmatpush.msra.mxu0 0.0
      %540 = vmatpush.msra.mxu0 0.0
      %541 = vmatpush.msra.mxu0 0.0
      %542 = vmatpush.msra.mxu0 0.0
      %543 = vmatpush.msra.mxu0 %v511
      %544 = vmatpush.msra.mxu0 %v510
      %545 = vmatpush.msra.mxu0 %v509
      %546 = vmatpush.msra.mxu0 %v508
      %547 = vmatpush.msra.mxu0 %v507
      %548 = vmatpush.msra.mxu0 %v506
      %549 = vmatpush.msra.mxu0 %v505
      %550 = vmatpush.msra.mxu0 %v504
      %551 = vmatmul.f32.gmra.mxu0 %v527
      %v552 = vpop.f32.mrf.mxu0
      %v553 = vadd.f32 %v513, %v552
      %554 = vmatmul.f32.gmra.mxu0 %v529
      %v555 = vpop.f32.mrf.mxu0
      %v556 = vadd.f32 %v513, %v555
      %557 = vmatmul.f32.gmra.mxu0 %v531
      %v558 = vpop.f32.mrf.mxu0
      %v559 = vadd.f32 %v513, %v558
      %560 = vmatmul.f32.gmra.mxu0 %v533
      %v561 = vpop.f32.mrf.mxu0
      %v562 = vadd.f32 %v513, %v561
      %563 = vdwg.mxu0
      %vm564 = vcmp.gt.f32.partialorder %v553, 0.0
      %vm565 = vcmp.gt.f32.partialorder %v556, 0.0
      %vm566 = vcmp.gt.f32.partialorder %v559, 0.0
      %vm567 = vcmp.gt.f32.partialorder %v562, 0.0
      %v568 = vmul.f32 %v553, 0.1
      %v569 = vmul.f32 %v556, 0.1
      %v570 = vmul.f32 %v559, 0.1
      %v571 = vmul.f32 %v562, 0.1
      %v572 = vsel %vm564, %v553, %v568
      %v573 = vsel %vm565, %v556, %v569
      %v574 = vsel %vm566, %v559, %v570
      %v575 = vsel %vm567, %v562, %v571
      %576 = vst.msk [vmem:[%s254] sm:$0xff] %vm268, %v572
      %577 = vst.msk [vmem:[%s254 + $0x8] sm:$0xff] %vm268, %v573
      %578 = vst.msk [vmem:[%s254 + $0x10] sm:$0xff] %vm268, %v574
      %579 = vst.msk [vmem:[%s254 + $0x18] sm:$0xff] %vm268, %v575
      %s580 = smul.u32 4, %s18
      %p581 = scmp.lt.s32.totalorder %s580, 7
      %s582 = scalar_select %p581, %s580, 7
      %s583 = smul.addr %s582, 8
      %s584 = scalar_lea.vmem %s6, %s583
      // Predicated region
      $region45: #{tpu_custom_call.1} parent=43 // pred_check
        %p585 = pneg %p167
      $region46: #{tpu_custom_call.1} parent=43 // pred_check_branch
        %587 = sbr.rel (%p585) target = $region48
      $region47: #{tpu_custom_call.1} parent=43 // pred_region
        %s588 = smul.u32 4, %s18
      $region48: #{tpu_custom_call.1} parent=43 // pred_fallthru
        _
    $region44: #{tpu_custom_call.1} parent=5 // pred_fallthru
      _
    %p589 = scmp.le.s32.totalorder 2, %s13
    // Predicated region
    $region49: #{tpu_custom_call.1} parent=5 // pred_check
      %p590 = pneg %p589
    $region50: #{tpu_custom_call.1} parent=5 // pred_check_branch
      %592 = sbr.rel (%p590) target = $region52
    $region51: #{tpu_custom_call.1} parent=5 // pred_region
      %s593 = ssub.s32 %s13, 2
      // Predicated region
      $region53: #{tpu_custom_call.1} parent=51 // pred_check
        %p594 = pneg %p173
      $region54: #{tpu_custom_call.1} parent=51 // pred_check_branch
        %596 = sbr.rel (%p594) target = $region56
      $region55: #{tpu_custom_call.1} parent=51 // pred_region
        %s597 = smul.u32 4, %s19
        %p598 = scmp.lt.s32.totalorder %s597, 7
        %s599 = scalar_select %p598, %s597, 7
        %s600 = smul.addr %s599, 8
        %s601 = scalar_lea.vmem %s6, %s600
      $region56: #{tpu_custom_call.1} parent=51 // pred_fallthru
        _
    $region52: #{tpu_custom_call.1} parent=5 // pred_fallthru
      _
  $region6: #{tpu_custom_call.1} parent=0 // loop_footer
    %s17 = sadd.s32 1, %s13
  $region7: #{tpu_custom_call.1} parent=0 // loop_footer_branch
    %12 = sbr.rel target = $region3
  $region8: #{tpu_custom_call.1} parent=0 // loop_exit
    _

</llo_original>
